<compile_context>
chip_gen: v6e
topology: v6e:2x2x1
jax: 0.10.0
libtpu: 0.0.40
codegen_flags: <defaults>
</compile_context>

<pallas_src>
import functools

import numpy as np
import jax
import jax.numpy as jnp
from jax.experimental import pallas as pl
from jax.experimental.pallas import tpu as pltpu


def _window_signature_kernel(seg_ref, *out_refs, depth, win_len, channels):
    """One grid step == one lane-tile of (window*batch) columns.

    seg_ref : (win_len, C, Nt)  windowed path samples, lane-dense in (window*batch).
    out_refs: `depth` refs; level d has block shape (C,)*d + (Nt,), tensor axes ordered
              (i_d, ..., i_1, n)  ("last tensor index most significant" convention).
    """
    C = channels
    seg = seg_ref[...].astype(jnp.float32)          # (T, C, Nt): one contiguous load
    deltas = seg[1:] - seg[:-1]                     # (T-1, C, Nt): one VPU subtract
    nt = seg.shape[-1]

    # Truncated signature levels, multi-dim; level d has shape (C,)*d + (Nt,).
    levels = [jnp.zeros((C,) * d + (nt,), jnp.float32) for d in range(1, depth + 1)]

    # S_new = S_old (x) exp(delta), level-by-level with a Horner scheme so every tensor
    # multiply is "<order-m tensor> (x) delta" == a plain broadcasted VPU multiply.
    # TODO(synk): for win_len >> step, exploit window overlap via Chen chunking (signature
    #             per disjoint step-chunk + chunk-product per window) to cut per-window work.
    for t in range(win_len - 1):
        delta = deltas[t]                           # (C, Nt)
        # Broadcast-shaped copies of delta, built ONCE per time step and reused across the
        # depth/Horner loops (k singleton dims): (C, 1, ..., 1, Nt).
        dexp = {k: delta.reshape((C,) + (1,) * k + (nt,)) for k in range(1, depth)}

        new_levels = []
        for d in range(1, depth + 1):
            acc = levels[0] + delta * (1.0 / d)                     # order-1 start
            for m in range(2, d + 1):
                # Right tensor-multiply of the order-(m-1) tensor `acc` by `delta`: the new
                # tensor index is prepended as axis 0 -> pure elementwise broadcast multiply.
                rm = dexp[m - 1] * acc[None]
                acc = levels[m - 1] + rm * (1.0 / (d - m + 1))
            new_levels.append(acc)
        levels = new_levels

    for d in range(depth):
        out_refs[d][...] = levels[d].astype(out_refs[d].dtype)


class ComputeWindowSignaturePallas:
    """Pallas/TPU re-implementation of ComputeWindowSignature (Sliding window, 'signature')."""

    # TODO(synk): sig_tfm='logsignature' (tensor log + Lyndon-basis projection), the optional
    #             rescaling/normalisation hooks, trick_info and non-Sliding window classes
    #             are not implemented; only the default 'signature' path is provided.

    def __init__(self, window_name='Sliding', window_kwargs=None, ds_length=None,
                 sig_tfm='signature', depth=3, rescaling=None, normalisation=None):
        assert sig_tfm == 'signature'
        assert rescaling is None and normalisation is None
        assert window_name == 'Sliding'
        self.window_name = window_name
        self.window_kwargs = dict(window_kwargs or {'length': 8, 'step': 4})
        self.ds_length = ds_length
        self.depth = depth

    def num_windows(self, length):
        w, s = self.window_kwargs['length'], self.window_kwargs['step']
        return (length - w) // s + 1

    def _window_starts(self, length):
        s = self.window_kwargs['step']
        return [i * s for i in range(self.num_windows(length))]

    def __call__(self, path):
        # path: (B, L, C) float32, signatory/PyTorch convention (batch, length, channels).
        B, L, C = path.shape
        depth = self.depth
        win_len = self.window_kwargs['length']
        starts = np.asarray(self._window_starts(L), np.int32)
        W = int(starts.shape[0])
        N = W * B                                   # lane dimension: all (window, batch) cols

        # ---- XLA-side layout plumbing: gather windows, put (window*batch) in the lane dim.
        idx = starts[:, None] + np.arange(win_len, dtype=np.int32)[None, :]   # (W, T) static
        segs = jnp.asarray(path, jnp.float32)[:, idx, :]                      # (B, W, T, C)
        segs = jnp.transpose(segs, (2, 3, 1, 0)).reshape(win_len, C, N)       # (T, C, W*B)

        # Pad the lane dim to a multiple of 128 -> unmasked, lane-dense loads/stores.
        N_pad = -(-N // 128) * 128
        if N_pad != N:
            segs = jnp.pad(segs, ((0, 0), (0, 0), (0, N_pad - N)))
        if N_pad % 512 == 0:
            Nt = 512
        elif N_pad % 256 == 0:
            Nt = 256
        else:
            Nt = 128
        grid = (N_pad // Nt,)

        kernel = functools.partial(_window_signature_kernel, depth=depth,
                                   win_len=win_len, channels=C)

        out_shape = tuple(jax.ShapeDtypeStruct((C,) * d + (N_pad,), jnp.float32)
                          for d in range(1, depth + 1))
        out_specs = [pl.BlockSpec((C,) * d + (Nt,), lambda n, d=d: (0,) * d + (n,))
                     for d in range(1, depth + 1)]
        in_specs = [pl.BlockSpec((win_len, C, Nt), lambda n: (0, 0, n))]

        grid_spec = pltpu.PrefetchScalarGridSpec(
            num_scalar_prefetch=0,
            grid=grid,
            in_specs=in_specs,
            out_specs=out_specs,
            scratch_shapes=[])

        levels = pl.pallas_call(
            kernel,
            out_shape=out_shape,
            grid_spec=grid_spec,
            compiler_params=pltpu.CompilerParams(
                dimension_semantics=("parallel",)),      # lane tiles are independent
        )(segs)

        # ---- Glue back to the signatory layout: (W, B, C**d) per level, levels concatenated.
        # Kernel tensor axes are (i_d, ..., i_1, n); reverse to (i_1, ..., i_d) row-major.
        sigs = []
        for d, lv in enumerate(levels, start=1):
            x = lv[..., :N].reshape((C,) * d + (W, B))        # axes (i_d..i_1, W, B)
            perm = (d, d + 1) + tuple(range(d - 1, -1, -1))   # -> (W, B, i_1, ..., i_d)
            sigs.append(jnp.transpose(x, perm).reshape(W, B, C ** d))
        signatures = jnp.concatenate(sigs, axis=-1)           # (W, B, C + C^2 + ... + C^depth)

        # Mimic the module's return structure: one window group, one signature per window.
        groups = [[signatures[w] for w in range(W)]]
        return groups, signatures


# ----------------------- pure-JAX reference (for verification) -----------------------

def _reference_signature(seg, depth):
    """Signature of a (B, L, C) segment, signatory flattening, via Chen's identity."""
    B, L, C = seg.shape
    inc = seg[:, 1:, :] - seg[:, :-1, :]
    levels = [jnp.zeros((B,) + (C,) * d, jnp.float32) for d in range(1, depth + 1)]
    for t in range(L - 1):
        delta = inc[:, t]
        e = [delta]
        for k in range(2, depth + 1):
            e.append(e[-1][..., None] * delta.reshape((B,) + (1,) * (k - 1) + (C,)) / k)
        new = []
        for d in range(1, depth + 1):
            acc = levels[d - 1] + e[d - 1]
            for j in range(1, d):
                k = d - j
                sj, ek = levels[j - 1], e[k - 1]
                acc = acc + sj.reshape(sj.shape + (1,) * k) * \
                    ek.reshape((B,) + (1,) * j + (C,) * k)
            new.append(acc)
        levels = new
    return jnp.concatenate([lv.reshape(B, -1) for lv in levels], axis=-1)


def _reference_window_signatures(path, depth, starts, win_len):
    outs = [_reference_signature(path[:, s:s + win_len, :], depth) for s in starts]
    return jnp.stack(outs, axis=0)   # (W, B, S)


# -------------------------------------- main -----------------------------------------

if __name__ == "__main__":
    key = jax.random.PRNGKey(0)

    # Test 1: module defaults, tiny shapes (single lane tile, padded 6 -> 128 lanes).
    B, L, C = 2, 16, 4
    depth, win_len, step = 3, 8, 4
    path = 0.1 * jax.random.normal(key, (B, L, C), dtype=jnp.float32)

    module = ComputeWindowSignaturePallas(
        window_name='Sliding', window_kwargs={'length': win_len, 'step': step},
        ds_length=L, sig_tfm='signature', depth=depth,
        rescaling=None, normalisation=None)

    _, sigs = module(path)
    sigs = jax.block_until_ready(sigs)
    ref = _reference_window_signatures(path, depth, module._window_starts(L), win_len)
    np.testing.assert_allclose(np.asarray(sigs), np.asarray(ref), rtol=1e-4, atol=1e-5)

    # Test 2: exercises lane padding + multi-step grid (W*B = 288 -> padded 384, 3 tiles).
    B2, L2, C2 = 32, 40, 3
    depth2, win2, step2 = 3, 8, 4
    path2 = 0.1 * jax.random.normal(jax.random.PRNGKey(1), (B2, L2, C2), dtype=jnp.float32)
    module2 = ComputeWindowSignaturePallas(
        window_name='Sliding', window_kwargs={'length': win2, 'step': step2},
        ds_length=L2, sig_tfm='signature', depth=depth2,
        rescaling=None, normalisation=None)
    _, sigs2 = module2(path2)
    sigs2 = jax.block_until_ready(sigs2)
    ref2 = _reference_window_signatures(path2, depth2, module2._window_starts(L2), win2)
    np.testing.assert_allclose(np.asarray(sigs2), np.asarray(ref2), rtol=1e-4, atol=1e-5)

    print("KERNEL_OK")
</pallas_src>

<mosaic_0001>
module attributes {stable_mosaic.version = 11 : i64} {
  func.func @_window_signature_kernel(%arg0: i32, %arg1: memref<8x4x128xf32, #tpu.memory_space<vmem>>, %arg2: memref<4x128xf32, #tpu.memory_space<vmem>>, %arg3: memref<4x4x128xf32, #tpu.memory_space<vmem>>, %arg4: memref<4x4x4x128xf32, #tpu.memory_space<vmem>>) attributes {dimension_semantics = [#tpu.dimension_semantics<parallel>], iteration_bounds = array<i64: 1>, scalar_prefetch = 0 : i64, scratch_operands = 0 : i64, tpu.core_type = #tpu.core_type<tc>, window_params = [{transform_indices = @transform_0, window_bounds = array<i64: 8, 4, 128>}, {transform_indices = @transform_1, window_bounds = array<i64: 4, 128>}, {transform_indices = @transform_2, window_bounds = array<i64: 4, 4, 128>}, {transform_indices = @transform_3, window_bounds = array<i64: 4, 4, 4, 128>}]} {
    %c0 = arith.constant 0 : index
    %c0_0 = arith.constant 0 : index
    %c0_1 = arith.constant 0 : index
    %0 = vector.load %arg1[%c0, %c0_0, %c0_1] : memref<8x4x128xf32, #tpu.memory_space<vmem>>, vector<8x4x128xf32>
    %1 = vector.extract_strided_slice %0 {offsets = [1, 0, 0], sizes = [7, 4, 128], strides = [1, 1, 1]} : vector<8x4x128xf32> to vector<7x4x128xf32>
    %2 = vector.extract_strided_slice %0 {offsets = [0, 0, 0], sizes = [7, 4, 128], strides = [1, 1, 1]} : vector<8x4x128xf32> to vector<7x4x128xf32>
    %3 = arith.subf %1, %2 : vector<7x4x128xf32>
    %cst = arith.constant 0.000000e+00 : f32
    %4 = vector.broadcast %cst : f32 to vector<4x128xf32>
    %cst_2 = arith.constant 0.000000e+00 : f32
    %5 = vector.broadcast %cst_2 : f32 to vector<4x4x128xf32>
    %cst_3 = arith.constant 0.000000e+00 : f32
    %6 = vector.broadcast %cst_3 : f32 to vector<4x4x4x128xf32>
    %7 = vector.extract_strided_slice %3 {offsets = [0, 0, 0], sizes = [1, 4, 128], strides = [1, 1, 1]} : vector<7x4x128xf32> to vector<1x4x128xf32>
    %8 = vector.shape_cast %7 : vector<1x4x128xf32> to vector<4x128xf32>
    %9 = vector.shape_cast %8 : vector<4x128xf32> to vector<4x1x128xf32>
    %10 = vector.shape_cast %8 : vector<4x128xf32> to vector<4x1x1x128xf32>
    %cst_4 = arith.constant 1.000000e+00 : f32
    %11 = vector.broadcast %cst_4 : f32 to vector<4x128xf32>
    %12 = arith.mulf %8, %11 : vector<4x128xf32>
    %13 = arith.addf %4, %12 : vector<4x128xf32>
    %cst_5 = arith.constant 5.000000e-01 : f32
    %14 = vector.broadcast %cst_5 : f32 to vector<4x128xf32>
    %15 = arith.mulf %8, %14 : vector<4x128xf32>
    %16 = arith.addf %4, %15 : vector<4x128xf32>
    %17 = vector.shape_cast %16 : vector<4x128xf32> to vector<1x4x128xf32>
    %18 = vector.broadcast %9 : vector<4x1x128xf32> to vector<4x4x128xf32>
    %19 = vector.broadcast %17 : vector<1x4x128xf32> to vector<4x4x128xf32>
    %20 = arith.mulf %18, %19 : vector<4x4x128xf32>
    %cst_6 = arith.constant 1.000000e+00 : f32
    %21 = vector.broadcast %cst_6 : f32 to vector<4x4x128xf32>
    %22 = arith.mulf %20, %21 : vector<4x4x128xf32>
    %23 = arith.addf %5, %22 : vector<4x4x128xf32>
    %cst_7 = arith.constant 0.333333343 : f32
    %24 = vector.broadcast %cst_7 : f32 to vector<4x128xf32>
    %25 = arith.mulf %8, %24 : vector<4x128xf32>
    %26 = arith.addf %4, %25 : vector<4x128xf32>
    %27 = vector.shape_cast %26 : vector<4x128xf32> to vector<1x4x128xf32>
    %28 = vector.broadcast %9 : vector<4x1x128xf32> to vector<4x4x128xf32>
    %29 = vector.broadcast %27 : vector<1x4x128xf32> to vector<4x4x128xf32>
    %30 = arith.mulf %28, %29 : vector<4x4x128xf32>
    %cst_8 = arith.constant 5.000000e-01 : f32
    %31 = vector.broadcast %cst_8 : f32 to vector<4x4x128xf32>
    %32 = arith.mulf %30, %31 : vector<4x4x128xf32>
    %33 = arith.addf %5, %32 : vector<4x4x128xf32>
    %34 = vector.shape_cast %33 : vector<4x4x128xf32> to vector<1x4x4x128xf32>
    %35 = vector.broadcast %10 : vector<4x1x1x128xf32> to vector<4x4x4x128xf32>
    %36 = vector.broadcast %34 : vector<1x4x4x128xf32> to vector<4x4x4x128xf32>
    %37 = arith.mulf %35, %36 : vector<4x4x4x128xf32>
    %cst_9 = arith.constant 1.000000e+00 : f32
    %38 = vector.broadcast %cst_9 : f32 to vector<4x4x4x128xf32>
    %39 = arith.mulf %37, %38 : vector<4x4x4x128xf32>
    %40 = arith.addf %6, %39 : vector<4x4x4x128xf32>
    %41 = vector.extract_strided_slice %3 {offsets = [1, 0, 0], sizes = [1, 4, 128], strides = [1, 1, 1]} : vector<7x4x128xf32> to vector<1x4x128xf32>
    %42 = vector.shape_cast %41 : vector<1x4x128xf32> to vector<4x128xf32>
    %43 = vector.shape_cast %42 : vector<4x128xf32> to vector<4x1x128xf32>
    %44 = vector.shape_cast %42 : vector<4x128xf32> to vector<4x1x1x128xf32>
    %cst_10 = arith.constant 1.000000e+00 : f32
    %45 = vector.broadcast %cst_10 : f32 to vector<4x128xf32>
    %46 = arith.mulf %42, %45 : vector<4x128xf32>
    %47 = arith.addf %13, %46 : vector<4x128xf32>
    %cst_11 = arith.constant 5.000000e-01 : f32
    %48 = vector.broadcast %cst_11 : f32 to vector<4x128xf32>
    %49 = arith.mulf %42, %48 : vector<4x128xf32>
    %50 = arith.addf %13, %49 : vector<4x128xf32>
    %51 = vector.shape_cast %50 : vector<4x128xf32> to vector<1x4x128xf32>
    %52 = vector.broadcast %43 : vector<4x1x128xf32> to vector<4x4x128xf32>
    %53 = vector.broadcast %51 : vector<1x4x128xf32> to vector<4x4x128xf32>
    %54 = arith.mulf %52, %53 : vector<4x4x128xf32>
    %cst_12 = arith.constant 1.000000e+00 : f32
    %55 = vector.broadcast %cst_12 : f32 to vector<4x4x128xf32>
    %56 = arith.mulf %54, %55 : vector<4x4x128xf32>
    %57 = arith.addf %23, %56 : vector<4x4x128xf32>
    %cst_13 = arith.constant 0.333333343 : f32
    %58 = vector.broadcast %cst_13 : f32 to vector<4x128xf32>
    %59 = arith.mulf %42, %58 : vector<4x128xf32>
    %60 = arith.addf %13, %59 : vector<4x128xf32>
    %61 = vector.shape_cast %60 : vector<4x128xf32> to vector<1x4x128xf32>
    %62 = vector.broadcast %43 : vector<4x1x128xf32> to vector<4x4x128xf32>
    %63 = vector.broadcast %61 : vector<1x4x128xf32> to vector<4x4x128xf32>
    %64 = arith.mulf %62, %63 : vector<4x4x128xf32>
    %cst_14 = arith.constant 5.000000e-01 : f32
    %65 = vector.broadcast %cst_14 : f32 to vector<4x4x128xf32>
    %66 = arith.mulf %64, %65 : vector<4x4x128xf32>
    %67 = arith.addf %23, %66 : vector<4x4x128xf32>
    %68 = vector.shape_cast %67 : vector<4x4x128xf32> to vector<1x4x4x128xf32>
    %69 = vector.broadcast %44 : vector<4x1x1x128xf32> to vector<4x4x4x128xf32>
    %70 = vector.broadcast %68 : vector<1x4x4x128xf32> to vector<4x4x4x128xf32>
    %71 = arith.mulf %69, %70 : vector<4x4x4x128xf32>
    %cst_15 = arith.constant 1.000000e+00 : f32
    %72 = vector.broadcast %cst_15 : f32 to vector<4x4x4x128xf32>
    %73 = arith.mulf %71, %72 : vector<4x4x4x128xf32>
    %74 = arith.addf %40, %73 : vector<4x4x4x128xf32>
    %75 = vector.extract_strided_slice %3 {offsets = [2, 0, 0], sizes = [1, 4, 128], strides = [1, 1, 1]} : vector<7x4x128xf32> to vector<1x4x128xf32>
    %76 = vector.shape_cast %75 : vector<1x4x128xf32> to vector<4x128xf32>
    %77 = vector.shape_cast %76 : vector<4x128xf32> to vector<4x1x128xf32>
    %78 = vector.shape_cast %76 : vector<4x128xf32> to vector<4x1x1x128xf32>
    %cst_16 = arith.constant 1.000000e+00 : f32
    %79 = vector.broadcast %cst_16 : f32 to vector<4x128xf32>
    %80 = arith.mulf %76, %79 : vector<4x128xf32>
    %81 = arith.addf %47, %80 : vector<4x128xf32>
    %cst_17 = arith.constant 5.000000e-01 : f32
    %82 = vector.broadcast %cst_17 : f32 to vector<4x128xf32>
    %83 = arith.mulf %76, %82 : vector<4x128xf32>
    %84 = arith.addf %47, %83 : vector<4x128xf32>
    %85 = vector.shape_cast %84 : vector<4x128xf32> to vector<1x4x128xf32>
    %86 = vector.broadcast %77 : vector<4x1x128xf32> to vector<4x4x128xf32>
    %87 = vector.broadcast %85 : vector<1x4x128xf32> to vector<4x4x128xf32>
    %88 = arith.mulf %86, %87 : vector<4x4x128xf32>
    %cst_18 = arith.constant 1.000000e+00 : f32
    %89 = vector.broadcast %cst_18 : f32 to vector<4x4x128xf32>
    %90 = arith.mulf %88, %89 : vector<4x4x128xf32>
    %91 = arith.addf %57, %90 : vector<4x4x128xf32>
    %cst_19 = arith.constant 0.333333343 : f32
    %92 = vector.broadcast %cst_19 : f32 to vector<4x128xf32>
    %93 = arith.mulf %76, %92 : vector<4x128xf32>
    %94 = arith.addf %47, %93 : vector<4x128xf32>
    %95 = vector.shape_cast %94 : vector<4x128xf32> to vector<1x4x128xf32>
    %96 = vector.broadcast %77 : vector<4x1x128xf32> to vector<4x4x128xf32>
    %97 = vector.broadcast %95 : vector<1x4x128xf32> to vector<4x4x128xf32>
    %98 = arith.mulf %96, %97 : vector<4x4x128xf32>
    %cst_20 = arith.constant 5.000000e-01 : f32
    %99 = vector.broadcast %cst_20 : f32 to vector<4x4x128xf32>
    %100 = arith.mulf %98, %99 : vector<4x4x128xf32>
    %101 = arith.addf %57, %100 : vector<4x4x128xf32>
    %102 = vector.shape_cast %101 : vector<4x4x128xf32> to vector<1x4x4x128xf32>
    %103 = vector.broadcast %78 : vector<4x1x1x128xf32> to vector<4x4x4x128xf32>
    %104 = vector.broadcast %102 : vector<1x4x4x128xf32> to vector<4x4x4x128xf32>
    %105 = arith.mulf %103, %104 : vector<4x4x4x128xf32>
    %cst_21 = arith.constant 1.000000e+00 : f32
    %106 = vector.broadcast %cst_21 : f32 to vector<4x4x4x128xf32>
    %107 = arith.mulf %105, %106 : vector<4x4x4x128xf32>
    %108 = arith.addf %74, %107 : vector<4x4x4x128xf32>
    %109 = vector.extract_strided_slice %3 {offsets = [3, 0, 0], sizes = [1, 4, 128], strides = [1, 1, 1]} : vector<7x4x128xf32> to vector<1x4x128xf32>
    %110 = vector.shape_cast %109 : vector<1x4x128xf32> to vector<4x128xf32>
    %111 = vector.shape_cast %110 : vector<4x128xf32> to vector<4x1x128xf32>
    %112 = vector.shape_cast %110 : vector<4x128xf32> to vector<4x1x1x128xf32>
    %cst_22 = arith.constant 1.000000e+00 : f32
    %113 = vector.broadcast %cst_22 : f32 to vector<4x128xf32>
    %114 = arith.mulf %110, %113 : vector<4x128xf32>
    %115 = arith.addf %81, %114 : vector<4x128xf32>
    %cst_23 = arith.constant 5.000000e-01 : f32
    %116 = vector.broadcast %cst_23 : f32 to vector<4x128xf32>
    %117 = arith.mulf %110, %116 : vector<4x128xf32>
    %118 = arith.addf %81, %117 : vector<4x128xf32>
    %119 = vector.shape_cast %118 : vector<4x128xf32> to vector<1x4x128xf32>
    %120 = vector.broadcast %111 : vector<4x1x128xf32> to vector<4x4x128xf32>
    %121 = vector.broadcast %119 : vector<1x4x128xf32> to vector<4x4x128xf32>
    %122 = arith.mulf %120, %121 : vector<4x4x128xf32>
    %cst_24 = arith.constant 1.000000e+00 : f32
    %123 = vector.broadcast %cst_24 : f32 to vector<4x4x128xf32>
    %124 = arith.mulf %122, %123 : vector<4x4x128xf32>
    %125 = arith.addf %91, %124 : vector<4x4x128xf32>
    %cst_25 = arith.constant 0.333333343 : f32
    %126 = vector.broadcast %cst_25 : f32 to vector<4x128xf32>
    %127 = arith.mulf %110, %126 : vector<4x128xf32>
    %128 = arith.addf %81, %127 : vector<4x128xf32>
    %129 = vector.shape_cast %128 : vector<4x128xf32> to vector<1x4x128xf32>
    %130 = vector.broadcast %111 : vector<4x1x128xf32> to vector<4x4x128xf32>
    %131 = vector.broadcast %129 : vector<1x4x128xf32> to vector<4x4x128xf32>
    %132 = arith.mulf %130, %131 : vector<4x4x128xf32>
    %cst_26 = arith.constant 5.000000e-01 : f32
    %133 = vector.broadcast %cst_26 : f32 to vector<4x4x128xf32>
    %134 = arith.mulf %132, %133 : vector<4x4x128xf32>
    %135 = arith.addf %91, %134 : vector<4x4x128xf32>
    %136 = vector.shape_cast %135 : vector<4x4x128xf32> to vector<1x4x4x128xf32>
    %137 = vector.broadcast %112 : vector<4x1x1x128xf32> to vector<4x4x4x128xf32>
    %138 = vector.broadcast %136 : vector<1x4x4x128xf32> to vector<4x4x4x128xf32>
    %139 = arith.mulf %137, %138 : vector<4x4x4x128xf32>
    %cst_27 = arith.constant 1.000000e+00 : f32
    %140 = vector.broadcast %cst_27 : f32 to vector<4x4x4x128xf32>
    %141 = arith.mulf %139, %140 : vector<4x4x4x128xf32>
    %142 = arith.addf %108, %141 : vector<4x4x4x128xf32>
    %143 = vector.extract_strided_slice %3 {offsets = [4, 0, 0], sizes = [1, 4, 128], strides = [1, 1, 1]} : vector<7x4x128xf32> to vector<1x4x128xf32>
    %144 = vector.shape_cast %143 : vector<1x4x128xf32> to vector<4x128xf32>
    %145 = vector.shape_cast %144 : vector<4x128xf32> to vector<4x1x128xf32>
    %146 = vector.shape_cast %144 : vector<4x128xf32> to vector<4x1x1x128xf32>
    %cst_28 = arith.constant 1.000000e+00 : f32
    %147 = vector.broadcast %cst_28 : f32 to vector<4x128xf32>
    %148 = arith.mulf %144, %147 : vector<4x128xf32>
    %149 = arith.addf %115, %148 : vector<4x128xf32>
    %cst_29 = arith.constant 5.000000e-01 : f32
    %150 = vector.broadcast %cst_29 : f32 to vector<4x128xf32>
    %151 = arith.mulf %144, %150 : vector<4x128xf32>
    %152 = arith.addf %115, %151 : vector<4x128xf32>
    %153 = vector.shape_cast %152 : vector<4x128xf32> to vector<1x4x128xf32>
    %154 = vector.broadcast %145 : vector<4x1x128xf32> to vector<4x4x128xf32>
    %155 = vector.broadcast %153 : vector<1x4x128xf32> to vector<4x4x128xf32>
    %156 = arith.mulf %154, %155 : vector<4x4x128xf32>
    %cst_30 = arith.constant 1.000000e+00 : f32
    %157 = vector.broadcast %cst_30 : f32 to vector<4x4x128xf32>
    %158 = arith.mulf %156, %157 : vector<4x4x128xf32>
    %159 = arith.addf %125, %158 : vector<4x4x128xf32>
    %cst_31 = arith.constant 0.333333343 : f32
    %160 = vector.broadcast %cst_31 : f32 to vector<4x128xf32>
    %161 = arith.mulf %144, %160 : vector<4x128xf32>
    %162 = arith.addf %115, %161 : vector<4x128xf32>
    %163 = vector.shape_cast %162 : vector<4x128xf32> to vector<1x4x128xf32>
    %164 = vector.broadcast %145 : vector<4x1x128xf32> to vector<4x4x128xf32>
    %165 = vector.broadcast %163 : vector<1x4x128xf32> to vector<4x4x128xf32>
    %166 = arith.mulf %164, %165 : vector<4x4x128xf32>
    %cst_32 = arith.constant 5.000000e-01 : f32
    %167 = vector.broadcast %cst_32 : f32 to vector<4x4x128xf32>
    %168 = arith.mulf %166, %167 : vector<4x4x128xf32>
    %169 = arith.addf %125, %168 : vector<4x4x128xf32>
    %170 = vector.shape_cast %169 : vector<4x4x128xf32> to vector<1x4x4x128xf32>
    %171 = vector.broadcast %146 : vector<4x1x1x128xf32> to vector<4x4x4x128xf32>
    %172 = vector.broadcast %170 : vector<1x4x4x128xf32> to vector<4x4x4x128xf32>
    %173 = arith.mulf %171, %172 : vector<4x4x4x128xf32>
    %cst_33 = arith.constant 1.000000e+00 : f32
    %174 = vector.broadcast %cst_33 : f32 to vector<4x4x4x128xf32>
    %175 = arith.mulf %173, %174 : vector<4x4x4x128xf32>
    %176 = arith.addf %142, %175 : vector<4x4x4x128xf32>
    %177 = vector.extract_strided_slice %3 {offsets = [5, 0, 0], sizes = [1, 4, 128], strides = [1, 1, 1]} : vector<7x4x128xf32> to vector<1x4x128xf32>
    %178 = vector.shape_cast %177 : vector<1x4x128xf32> to vector<4x128xf32>
    %179 = vector.shape_cast %178 : vector<4x128xf32> to vector<4x1x128xf32>
    %180 = vector.shape_cast %178 : vector<4x128xf32> to vector<4x1x1x128xf32>
    %cst_34 = arith.constant 1.000000e+00 : f32
    %181 = vector.broadcast %cst_34 : f32 to vector<4x128xf32>
    %182 = arith.mulf %178, %181 : vector<4x128xf32>
    %183 = arith.addf %149, %182 : vector<4x128xf32>
    %cst_35 = arith.constant 5.000000e-01 : f32
    %184 = vector.broadcast %cst_35 : f32 to vector<4x128xf32>
    %185 = arith.mulf %178, %184 : vector<4x128xf32>
    %186 = arith.addf %149, %185 : vector<4x128xf32>
    %187 = vector.shape_cast %186 : vector<4x128xf32> to vector<1x4x128xf32>
    %188 = vector.broadcast %179 : vector<4x1x128xf32> to vector<4x4x128xf32>
    %189 = vector.broadcast %187 : vector<1x4x128xf32> to vector<4x4x128xf32>
    %190 = arith.mulf %188, %189 : vector<4x4x128xf32>
    %cst_36 = arith.constant 1.000000e+00 : f32
    %191 = vector.broadcast %cst_36 : f32 to vector<4x4x128xf32>
    %192 = arith.mulf %190, %191 : vector<4x4x128xf32>
    %193 = arith.addf %159, %192 : vector<4x4x128xf32>
    %cst_37 = arith.constant 0.333333343 : f32
    %194 = vector.broadcast %cst_37 : f32 to vector<4x128xf32>
    %195 = arith.mulf %178, %194 : vector<4x128xf32>
    %196 = arith.addf %149, %195 : vector<4x128xf32>
    %197 = vector.shape_cast %196 : vector<4x128xf32> to vector<1x4x128xf32>
    %198 = vector.broadcast %179 : vector<4x1x128xf32> to vector<4x4x128xf32>
    %199 = vector.broadcast %197 : vector<1x4x128xf32> to vector<4x4x128xf32>
    %200 = arith.mulf %198, %199 : vector<4x4x128xf32>
    %cst_38 = arith.constant 5.000000e-01 : f32
    %201 = vector.broadcast %cst_38 : f32 to vector<4x4x128xf32>
    %202 = arith.mulf %200, %201 : vector<4x4x128xf32>
    %203 = arith.addf %159, %202 : vector<4x4x128xf32>
    %204 = vector.shape_cast %203 : vector<4x4x128xf32> to vector<1x4x4x128xf32>
    %205 = vector.broadcast %180 : vector<4x1x1x128xf32> to vector<4x4x4x128xf32>
    %206 = vector.broadcast %204 : vector<1x4x4x128xf32> to vector<4x4x4x128xf32>
    %207 = arith.mulf %205, %206 : vector<4x4x4x128xf32>
    %cst_39 = arith.constant 1.000000e+00 : f32
    %208 = vector.broadcast %cst_39 : f32 to vector<4x4x4x128xf32>
    %209 = arith.mulf %207, %208 : vector<4x4x4x128xf32>
    %210 = arith.addf %176, %209 : vector<4x4x4x128xf32>
    %211 = vector.extract_strided_slice %3 {offsets = [6, 0, 0], sizes = [1, 4, 128], strides = [1, 1, 1]} : vector<7x4x128xf32> to vector<1x4x128xf32>
    %212 = vector.shape_cast %211 : vector<1x4x128xf32> to vector<4x128xf32>
    %213 = vector.shape_cast %212 : vector<4x128xf32> to vector<4x1x128xf32>
    %214 = vector.shape_cast %212 : vector<4x128xf32> to vector<4x1x1x128xf32>
    %cst_40 = arith.constant 1.000000e+00 : f32
    %215 = vector.broadcast %cst_40 : f32 to vector<4x128xf32>
    %216 = arith.mulf %212, %215 : vector<4x128xf32>
    %217 = arith.addf %183, %216 : vector<4x128xf32>
    %cst_41 = arith.constant 5.000000e-01 : f32
    %218 = vector.broadcast %cst_41 : f32 to vector<4x128xf32>
    %219 = arith.mulf %212, %218 : vector<4x128xf32>
    %220 = arith.addf %183, %219 : vector<4x128xf32>
    %221 = vector.shape_cast %220 : vector<4x128xf32> to vector<1x4x128xf32>
    %222 = vector.broadcast %213 : vector<4x1x128xf32> to vector<4x4x128xf32>
    %223 = vector.broadcast %221 : vector<1x4x128xf32> to vector<4x4x128xf32>
    %224 = arith.mulf %222, %223 : vector<4x4x128xf32>
    %cst_42 = arith.constant 1.000000e+00 : f32
    %225 = vector.broadcast %cst_42 : f32 to vector<4x4x128xf32>
    %226 = arith.mulf %224, %225 : vector<4x4x128xf32>
    %227 = arith.addf %193, %226 : vector<4x4x128xf32>
    %cst_43 = arith.constant 0.333333343 : f32
    %228 = vector.broadcast %cst_43 : f32 to vector<4x128xf32>
    %229 = arith.mulf %212, %228 : vector<4x128xf32>
    %230 = arith.addf %183, %229 : vector<4x128xf32>
    %231 = vector.shape_cast %230 : vector<4x128xf32> to vector<1x4x128xf32>
    %232 = vector.broadcast %213 : vector<4x1x128xf32> to vector<4x4x128xf32>
    %233 = vector.broadcast %231 : vector<1x4x128xf32> to vector<4x4x128xf32>
    %234 = arith.mulf %232, %233 : vector<4x4x128xf32>
    %cst_44 = arith.constant 5.000000e-01 : f32
    %235 = vector.broadcast %cst_44 : f32 to vector<4x4x128xf32>
    %236 = arith.mulf %234, %235 : vector<4x4x128xf32>
    %237 = arith.addf %193, %236 : vector<4x4x128xf32>
    %238 = vector.shape_cast %237 : vector<4x4x128xf32> to vector<1x4x4x128xf32>
    %239 = vector.broadcast %214 : vector<4x1x1x128xf32> to vector<4x4x4x128xf32>
    %240 = vector.broadcast %238 : vector<1x4x4x128xf32> to vector<4x4x4x128xf32>
    %241 = arith.mulf %239, %240 : vector<4x4x4x128xf32>
    %cst_45 = arith.constant 1.000000e+00 : f32
    %242 = vector.broadcast %cst_45 : f32 to vector<4x4x4x128xf32>
    %243 = arith.mulf %241, %242 : vector<4x4x4x128xf32>
    %244 = arith.addf %210, %243 : vector<4x4x4x128xf32>
    %c0_46 = arith.constant 0 : index
    %c0_47 = arith.constant 0 : index
    %245 = vector.load %arg2[%c0_46, %c0_47] : memref<4x128xf32, #tpu.memory_space<vmem>>, vector<4x128xf32>
    tpu.vector_store %arg2[%c0_46, %c0_47], %217 {strides = array<i32>} : memref<4x128xf32, #tpu.memory_space<vmem>>, vector<4x128xf32>,
    %c0_48 = arith.constant 0 : index
    %c0_49 = arith.constant 0 : index
    %c0_50 = arith.constant 0 : index
    %246 = vector.load %arg3[%c0_48, %c0_49, %c0_50] : memref<4x4x128xf32, #tpu.memory_space<vmem>>, vector<4x4x128xf32>
    tpu.vector_store %arg3[%c0_48, %c0_49, %c0_50], %227 {strides = array<i32>} : memref<4x4x128xf32, #tpu.memory_space<vmem>>, vector<4x4x128xf32>,
    %c0_51 = arith.constant 0 : index
    %c0_52 = arith.constant 0 : index
    %c0_53 = arith.constant 0 : index
    %c0_54 = arith.constant 0 : index
    %247 = vector.load %arg4[%c0_51, %c0_52, %c0_53, %c0_54] : memref<4x4x4x128xf32, #tpu.memory_space<vmem>>, vector<4x4x4x128xf32>
    tpu.vector_store %arg4[%c0_51, %c0_52, %c0_53, %c0_54], %244 {strides = array<i32>} : memref<4x4x4x128xf32, #tpu.memory_space<vmem>>, vector<4x4x4x128xf32>,
    return
  }
  func.func @transform_0(%arg0: i32) -> (i32, i32, i32) {
    %c0_i32 = arith.constant 0 : i32
    %c0_i32_0 = arith.constant 0 : i32
    %c0_i32_1 = arith.constant 0 : i32
    return %c0_i32, %c0_i32_0, %arg0 : i32, i32, i32
  }
  func.func @transform_1(%arg0: i32) -> (i32, i32) {
    %c0_i32 = arith.constant 0 : i32
    %c0_i32_0 = arith.constant 0 : i32
    return %c0_i32, %arg0 : i32, i32
  }
  func.func @transform_2(%arg0: i32) -> (i32, i32, i32) {
    %c0_i32 = arith.constant 0 : i32
    %c0_i32_0 = arith.constant 0 : i32
    %c0_i32_1 = arith.constant 0 : i32
    return %c0_i32, %c0_i32_0, %arg0 : i32, i32, i32
  }
  func.func @transform_3(%arg0: i32) -> (i32, i32, i32, i32) {
    %c0_i32 = arith.constant 0 : i32
    %c0_i32_0 = arith.constant 0 : i32
    %c0_i32_1 = arith.constant 0 : i32
    %c0_i32_2 = arith.constant 0 : i32
    return %c0_i32, %c0_i32_0, %c0_i32_1, %arg0 : i32, i32, i32, i32
  }
}

</mosaic_0001>

<llo_original>
// kernel: tpu_custom_call.1
$region0: #{tpu_custom_call.1}
  #allocation0 [shape = 'u32[]', space=smem, size = 0x4, offset = 0x4, fixed_abs, tag = 'smem constant byte address 0x4 - core index']
  #allocation1 [shape = 'u32[144,128]{1,0:T(1,128)}', space=vmem, size = 0x12000, scoped, tag = 'internal scratch']
  %s0 = inlined_call_operand.hbm [shape: f32[8,4,128], index: 0, kind: input, shape index: {}]
  %s1 = inlined_call_operand.hbm [shape: f32[4,128], index: 1, kind: output, shape index: {0}]
  %s2 = inlined_call_operand.hbm [shape: f32[4,4,128], index: 2, kind: output, shape index: {1}]
  %s3 = inlined_call_operand.hbm [shape: f32[4,4,4,128], index: 3, kind: output, shape index: {2}]
  %4 = xla_tuple %s1, %s2, %s3
  %s5 = sld [smem:[#allocation0]]
  $region34: #{tpu_custom_call.1} parent=0
    _
  %s7 = ssub.s32 1, %s5
  %s8 = scalar_select 0, %s7, %s5
  $region1: #{tpu_custom_call.1} parent=0
    #allocation2 [shape = 'u8[16384]{0}', space=vmem, size = 0x4000, scoped, tag = 'input window, operand 0, single buffered']
    #allocation3 [shape = 's32[1]{0}', space=sflag, size = 0x4, scoped, tag = 'scoped memory for tpu_custom_call.1']
    #allocation4 [shape = 's32[1]{0}', space=sflag, size = 0x4, scoped, tag = 'scoped memory for tpu_custom_call.1']
    #allocation5 [shape = 'u8[2048]{0}', space=vmem, size = 0x800, scoped, tag = 'output window, operand 0, single buffered']
    #allocation6 [shape = 'u8[8192]{0}', space=vmem, size = 0x2000, scoped, tag = 'output window, operand 1, single buffered']
    #allocation7 [shape = 's32[1]{0}', space=sflag, size = 0x4, scoped, tag = 'scoped memory for tpu_custom_call.1']
    #allocation8 [shape = 'u8[32768]{0}', space=vmem, size = 0x8000, scoped, tag = 'output window, operand 2, single buffered']
    %9 = vsyncpa [#allocation3], 0
    %10 = vsyncpa [#allocation4], 0
    %11 = vsyncpa [#allocation7], 0
    // Predicated region
    $region2: #{tpu_custom_call.1} parent=1 // pred_check
      _
    $region3: #{tpu_custom_call.1} parent=1 // pred_check_branch
      %13 = sbr.rel (0) target = $region5
    $region4: #{tpu_custom_call.1} parent=1 // pred_region
      %s15 = ssub.s32 512, 512
      %16 = vsyncadd [#allocation3], %s15
      %s17 = sshll.u32 [#allocation2], 4
      %s18 = int_to_ptr.vmem [resolvable:$true] %s17
      %23 = dma.hbm_to_vmem [thread:$0]  %s0, 512, %s18, [#allocation3], 64, 64, 4
    $region5: #{tpu_custom_call.1} parent=1 // pred_fallthru
      _
    // Predicated region
    $region6: #{tpu_custom_call.1} parent=1 // pred_check
      _
    $region7: #{tpu_custom_call.1} parent=1 // pred_check_branch
      %25 = sbr.rel (0) target = $region9
    $region8: #{tpu_custom_call.1} parent=1 // pred_region
      %26 = dma.done [#allocation3], 512
    $region9: #{tpu_custom_call.1} parent=1 // pred_fallthru
      _
    %v27 = vld [vmem:[#allocation2] sm:$0xf]
    %v28 = vld [vmem:[#allocation2 + $0x4] sm:$0xf]
    %v29 = vld [vmem:[#allocation2 + $0x8] sm:$0xf]
    %v30 = vld [vmem:[#allocation2 + $0xc] sm:$0xf]
    %v31 = vld [vmem:[#allocation2 + $0x10] sm:$0xf]
    %v32 = vld [vmem:[#allocation2 + $0x14] sm:$0xf]
    %v33 = vld [vmem:[#allocation2 + $0x18] sm:$0xf]
    %v34 = vld [vmem:[#allocation2 + $0x1c] sm:$0xf]
    %v35 = vsub.f32 %v28, %v27
    %v36 = vsub.f32 %v29, %v28
    %v37 = vsub.f32 %v30, %v29
    %v38 = vsub.f32 %v31, %v30
    %v39 = vsub.f32 %v32, %v31
    %v40 = vsub.f32 %v33, %v32
    %v41 = vsub.f32 %v34, %v33
    %v44 = vunpack.c.l.s4 1966171168
    %v45 = vunpack.c.0.s8 %v44
    %v46 = vlaneseq
    %v47 = vshrl.u32 %v46, 7
    %v48 = vsub.s32 %v45, %v47
    %v49 = vrot.slane %v35, %v48
    %v50 = vcombine.high %v49, %v49
    %v52 = vunpack.c.l.s4 1966171168
    %v53 = vunpack.c.0.s8 %v52
    %v54 = vlaneseq
    %v55 = vshrl.u32 %v54, 7
    %v56 = vsub.s32 %v53, %v55
    %v57 = vrot.slane %v49, %v56
    %v59 = vunpack.c.l.s4 1966171168
    %v60 = vunpack.c.0.s8 %v59
    %v61 = vlaneseq
    %v62 = vshrl.u32 %v61, 7
    %v63 = vsub.s32 %v60, %v62
    %v64 = vrot.slane %v50, %v63
    %v65 = vcombine.high %v57, %v57
    %v66 = vcombine.high %v64, %v64
    %v67 = vadd.f32 %v35, 0.0
    %v68 = vmul.f32 %v35, 0.5
    %v69 = vadd.f32 %v68, 0.0
    %v70 = vlaneseq
    %v71 = vshrl.u32 %v70, 7
    %v72 = vsub.s32 0, %v71
    %v73 = vrot.slane %v57, %v72
    %v74 = vlaneseq
    %v75 = vshrl.u32 %v74, 7
    %v76 = vsub.s32 0, %v75
    %v77 = vrot.slane %v64, %v76
    %v78 = vlaneseq
    %v79 = vshrl.u32 %v78, 7
    %v80 = vsub.s32 0, %v79
    %v81 = vrot.slane %v65, %v80
    %v82 = vlaneseq
    %v83 = vshrl.u32 %v82, 7
    %v84 = vsub.s32 0, %v83
    %v85 = vrot.slane %v66, %v84
    %v90 = vmul.f32 %v73, %v69
    %v91 = vmul.f32 %v77, %v69
    %v92 = vmul.f32 %v81, %v69
    %v93 = vmul.f32 %v85, %v69
    %v94 = vadd.f32 %v90, 0.0
    %v95 = vadd.f32 %v91, 0.0
    %v96 = vadd.f32 %v92, 0.0
    %v97 = vadd.f32 %v93, 0.0
    %v98 = vmul.f32 %v35, 0.33333334
    %v99 = vadd.f32 %v98, 0.0
    %v100 = vmul.f32 %v73, %v99
    %v101 = vmul.f32 %v77, %v99
    %v102 = vmul.f32 %v81, %v99
    %v103 = vmul.f32 %v85, %v99
    %v104 = vmul.f32 %v100, 0.5
    %v105 = vmul.f32 %v101, 0.5
    %v106 = vmul.f32 %v102, 0.5
    %v107 = vmul.f32 %v103, 0.5
    %v108 = vadd.f32 %v104, 0.0
    %v109 = vadd.f32 %v105, 0.0
    %v110 = vadd.f32 %v106, 0.0
    %v111 = vadd.f32 %v107, 0.0
    %v112 = vmul.f32 %v73, %v108
    %v113 = vmul.f32 %v73, %v109
    %v114 = vmul.f32 %v73, %v110
    %v115 = vmul.f32 %v73, %v111
    %v116 = vmul.f32 %v77, %v108
    %v117 = vmul.f32 %v77, %v109
    %v118 = vmul.f32 %v77, %v110
    %v119 = vmul.f32 %v77, %v111
    %v120 = vmul.f32 %v81, %v108
    %v121 = vmul.f32 %v81, %v109
    %v122 = vmul.f32 %v81, %v110
    %v123 = vmul.f32 %v81, %v111
    %v124 = vmul.f32 %v85, %v108
    %v125 = vmul.f32 %v85, %v109
    %v126 = vmul.f32 %v85, %v110
    %v127 = vmul.f32 %v85, %v111
    %v128 = vadd.f32 %v112, 0.0
    %v129 = vadd.f32 %v113, 0.0
    %v130 = vadd.f32 %v114, 0.0
    %v131 = vadd.f32 %v115, 0.0
    %v132 = vadd.f32 %v116, 0.0
    %v133 = vadd.f32 %v117, 0.0
    %v134 = vadd.f32 %v118, 0.0
    %v135 = vadd.f32 %v119, 0.0
    %v136 = vadd.f32 %v120, 0.0
    %v137 = vadd.f32 %v121, 0.0
    %v138 = vadd.f32 %v122, 0.0
    %v139 = vadd.f32 %v123, 0.0
    %v140 = vadd.f32 %v124, 0.0
    %v141 = vadd.f32 %v125, 0.0
    %v142 = vadd.f32 %v126, 0.0
    %v143 = vadd.f32 %v127, 0.0
    %v146 = vunpack.c.l.s4 1966171168
    %v147 = vunpack.c.0.s8 %v146
    %v148 = vlaneseq
    %v149 = vshrl.u32 %v148, 7
    %v150 = vsub.s32 %v147, %v149
    %v151 = vrot.slane %v36, %v150
    %v152 = vcombine.high %v151, %v151
    %v154 = vunpack.c.l.s4 1966171168
    %v155 = vunpack.c.0.s8 %v154
    %v156 = vlaneseq
    %v157 = vshrl.u32 %v156, 7
    %v158 = vsub.s32 %v155, %v157
    %v159 = vrot.slane %v151, %v158
    %v161 = vunpack.c.l.s4 1966171168
    %v162 = vunpack.c.0.s8 %v161
    %v163 = vlaneseq
    %v164 = vshrl.u32 %v163, 7
    %v165 = vsub.s32 %v162, %v164
    %v166 = vrot.slane %v152, %v165
    %v167 = vcombine.high %v159, %v159
    %v168 = vcombine.high %v166, %v166
    %v169 = vadd.f32 %v67, %v36
    %v170 = vmul.f32 %v36, 0.5
    %v171 = vadd.f32 %v67, %v170
    %v172 = vlaneseq
    %v173 = vshrl.u32 %v172, 7
    %v174 = vsub.s32 0, %v173
    %v175 = vrot.slane %v159, %v174
    %v176 = vlaneseq
    %v177 = vshrl.u32 %v176, 7
    %v178 = vsub.s32 0, %v177
    %v179 = vrot.slane %v166, %v178
    %v180 = vlaneseq
    %v181 = vshrl.u32 %v180, 7
    %v182 = vsub.s32 0, %v181
    %v183 = vrot.slane %v167, %v182
    %v184 = vlaneseq
    %v185 = vshrl.u32 %v184, 7
    %v186 = vsub.s32 0, %v185
    %v187 = vrot.slane %v168, %v186
    %v192 = vmul.f32 %v175, %v171
    %v193 = vmul.f32 %v179, %v171
    %v194 = vmul.f32 %v183, %v171
    %v195 = vmul.f32 %v187, %v171
    %v196 = vadd.f32 %v94, %v192
    %v197 = vadd.f32 %v95, %v193
    %v198 = vadd.f32 %v96, %v194
    %v199 = vadd.f32 %v97, %v195
    %v200 = vmul.f32 %v36, 0.33333334
    %v201 = vadd.f32 %v67, %v200
    %v202 = vmul.f32 %v175, %v201
    %v203 = vmul.f32 %v179, %v201
    %v204 = vmul.f32 %v183, %v201
    %v205 = vmul.f32 %v187, %v201
    %v206 = vmul.f32 %v202, 0.5
    %v207 = vmul.f32 %v203, 0.5
    %v208 = vmul.f32 %v204, 0.5
    %v209 = vmul.f32 %v205, 0.5
    %v210 = vadd.f32 %v94, %v206
    %v211 = vadd.f32 %v95, %v207
    %v212 = vadd.f32 %v96, %v208
    %v213 = vadd.f32 %v97, %v209
    %v214 = vmul.f32 %v175, %v210
    %v215 = vmul.f32 %v175, %v211
    %v216 = vmul.f32 %v175, %v212
    %v217 = vmul.f32 %v175, %v213
    %v218 = vmul.f32 %v179, %v210
    %v219 = vmul.f32 %v179, %v211
    %v220 = vmul.f32 %v179, %v212
    %v221 = vmul.f32 %v179, %v213
    %v222 = vmul.f32 %v183, %v210
    %v223 = vmul.f32 %v183, %v211
    %v224 = vmul.f32 %v183, %v212
    %v225 = vmul.f32 %v183, %v213
    %v226 = vmul.f32 %v187, %v210
    %v227 = vmul.f32 %v187, %v211
    %v228 = vmul.f32 %v187, %v212
    %v229 = vmul.f32 %v187, %v213
    %v230 = vadd.f32 %v128, %v214
    %v231 = vadd.f32 %v129, %v215
    %v232 = vadd.f32 %v130, %v216
    %v233 = vadd.f32 %v131, %v217
    %v234 = vadd.f32 %v132, %v218
    %v235 = vadd.f32 %v133, %v219
    %v236 = vadd.f32 %v134, %v220
    %v237 = vadd.f32 %v135, %v221
    %v238 = vadd.f32 %v136, %v222
    %v239 = vadd.f32 %v137, %v223
    %v240 = vadd.f32 %v138, %v224
    %v241 = vadd.f32 %v139, %v225
    %v242 = vadd.f32 %v140, %v226
    %v243 = vadd.f32 %v141, %v227
    %v244 = vadd.f32 %v142, %v228
    %v245 = vadd.f32 %v143, %v229
    %v248 = vunpack.c.l.s4 1966171168
    %v249 = vunpack.c.0.s8 %v248
    %v250 = vlaneseq
    %v251 = vshrl.u32 %v250, 7
    %v252 = vsub.s32 %v249, %v251
    %v253 = vrot.slane %v37, %v252
    %v254 = vcombine.high %v253, %v253
    %v256 = vunpack.c.l.s4 1966171168
    %v257 = vunpack.c.0.s8 %v256
    %v258 = vlaneseq
    %v259 = vshrl.u32 %v258, 7
    %v260 = vsub.s32 %v257, %v259
    %v261 = vrot.slane %v253, %v260
    %v263 = vunpack.c.l.s4 1966171168
    %v264 = vunpack.c.0.s8 %v263
    %v265 = vlaneseq
    %v266 = vshrl.u32 %v265, 7
    %v267 = vsub.s32 %v264, %v266
    %v268 = vrot.slane %v254, %v267
    %v269 = vcombine.high %v261, %v261
    %v270 = vcombine.high %v268, %v268
    %v271 = vadd.f32 %v169, %v37
    %v272 = vmul.f32 %v37, 0.5
    %v273 = vadd.f32 %v169, %v272
    %v274 = vlaneseq
    %v275 = vshrl.u32 %v274, 7
    %v276 = vsub.s32 0, %v275
    %v277 = vrot.slane %v261, %v276
    %v278 = vlaneseq
    %v279 = vshrl.u32 %v278, 7
    %v280 = vsub.s32 0, %v279
    %v281 = vrot.slane %v268, %v280
    %v282 = vlaneseq
    %v283 = vshrl.u32 %v282, 7
    %v284 = vsub.s32 0, %v283
    %v285 = vrot.slane %v269, %v284
    %v286 = vlaneseq
    %v287 = vshrl.u32 %v286, 7
    %v288 = vsub.s32 0, %v287
    %v289 = vrot.slane %v270, %v288
    %v294 = vmul.f32 %v277, %v273
    %v295 = vmul.f32 %v281, %v273
    %v296 = vmul.f32 %v285, %v273
    %v297 = vmul.f32 %v289, %v273
    %v298 = vadd.f32 %v196, %v294
    %v299 = vadd.f32 %v197, %v295
    %v300 = vadd.f32 %v198, %v296
    %v301 = vadd.f32 %v199, %v297
    %v302 = vmul.f32 %v37, 0.33333334
    %v303 = vadd.f32 %v169, %v302
    %v304 = vmul.f32 %v277, %v303
    %v305 = vmul.f32 %v281, %v303
    %v306 = vmul.f32 %v285, %v303
    %v307 = vmul.f32 %v289, %v303
    %v308 = vmul.f32 %v304, 0.5
    %v309 = vmul.f32 %v305, 0.5
    %v310 = vmul.f32 %v306, 0.5
    %v311 = vmul.f32 %v307, 0.5
    %v312 = vadd.f32 %v196, %v308
    %v313 = vadd.f32 %v197, %v309
    %v314 = vadd.f32 %v198, %v310
    %v315 = vadd.f32 %v199, %v311
    %v316 = vmul.f32 %v277, %v312
    %v317 = vmul.f32 %v277, %v313
    %v318 = vmul.f32 %v277, %v314
    %v319 = vmul.f32 %v277, %v315
    %v320 = vmul.f32 %v281, %v312
    %v321 = vmul.f32 %v281, %v313
    %v322 = vmul.f32 %v281, %v314
    %v323 = vmul.f32 %v281, %v315
    %v324 = vmul.f32 %v285, %v312
    %v325 = vmul.f32 %v285, %v313
    %v326 = vmul.f32 %v285, %v314
    %v327 = vmul.f32 %v285, %v315
    %v328 = vmul.f32 %v289, %v312
    %v329 = vmul.f32 %v289, %v313
    %v330 = vmul.f32 %v289, %v314
    %v331 = vmul.f32 %v289, %v315
    %v332 = vadd.f32 %v230, %v316
    %v333 = vadd.f32 %v231, %v317
    %v334 = vadd.f32 %v232, %v318
    %v335 = vadd.f32 %v233, %v319
    %v336 = vadd.f32 %v234, %v320
    %v337 = vadd.f32 %v235, %v321
    %v338 = vadd.f32 %v236, %v322
    %v339 = vadd.f32 %v237, %v323
    %v340 = vadd.f32 %v238, %v324
    %v341 = vadd.f32 %v239, %v325
    %v342 = vadd.f32 %v240, %v326
    %v343 = vadd.f32 %v241, %v327
    %v344 = vadd.f32 %v242, %v328
    %v345 = vadd.f32 %v243, %v329
    %v346 = vadd.f32 %v244, %v330
    %v347 = vadd.f32 %v245, %v331
    %v350 = vunpack.c.l.s4 1966171168
    %v351 = vunpack.c.0.s8 %v350
    %v352 = vlaneseq
    %v353 = vshrl.u32 %v352, 7
    %v354 = vsub.s32 %v351, %v353
    %v355 = vrot.slane %v38, %v354
    %v356 = vcombine.high %v355, %v355
    %v358 = vunpack.c.l.s4 1966171168
    %v359 = vunpack.c.0.s8 %v358
    %v360 = vlaneseq
    %v361 = vshrl.u32 %v360, 7
    %v362 = vsub.s32 %v359, %v361
    %v363 = vrot.slane %v355, %v362
    %v365 = vunpack.c.l.s4 1966171168
    %v366 = vunpack.c.0.s8 %v365
    %v367 = vlaneseq
    %v368 = vshrl.u32 %v367, 7
    %v369 = vsub.s32 %v366, %v368
    %v370 = vrot.slane %v356, %v369
    %v371 = vcombine.high %v363, %v363
    %v372 = vcombine.high %v370, %v370
    %v373 = vadd.f32 %v271, %v38
    %v374 = vmul.f32 %v38, 0.5
    %v375 = vadd.f32 %v271, %v374
    %v376 = vlaneseq
    %v377 = vshrl.u32 %v376, 7
    %v378 = vsub.s32 0, %v377
    %v379 = vrot.slane %v363, %v378
    %v380 = vlaneseq
    %v381 = vshrl.u32 %v380, 7
    %v382 = vsub.s32 0, %v381
    %v383 = vrot.slane %v370, %v382
    %v384 = vlaneseq
    %v385 = vshrl.u32 %v384, 7
    %v386 = vsub.s32 0, %v385
    %v387 = vrot.slane %v371, %v386
    %v388 = vlaneseq
    %v389 = vshrl.u32 %v388, 7
    %v390 = vsub.s32 0, %v389
    %v391 = vrot.slane %v372, %v390
    %v396 = vmul.f32 %v379, %v375
    %v397 = vmul.f32 %v383, %v375
    %v398 = vmul.f32 %v387, %v375
    %v399 = vmul.f32 %v391, %v375
    %v400 = vadd.f32 %v298, %v396
    %v401 = vadd.f32 %v299, %v397
    %v402 = vadd.f32 %v300, %v398
    %v403 = vadd.f32 %v301, %v399
    %v404 = vmul.f32 %v38, 0.33333334
    %v405 = vadd.f32 %v271, %v404
    %v406 = vmul.f32 %v379, %v405
    %v407 = vmul.f32 %v383, %v405
    %v408 = vmul.f32 %v387, %v405
    %v409 = vmul.f32 %v391, %v405
    %v410 = vmul.f32 %v406, 0.5
    %v411 = vmul.f32 %v407, 0.5
    %v412 = vmul.f32 %v408, 0.5
    %v413 = vmul.f32 %v409, 0.5
    %v414 = vadd.f32 %v298, %v410
    %v415 = vadd.f32 %v299, %v411
    %v416 = vadd.f32 %v300, %v412
    %v417 = vadd.f32 %v301, %v413
    %v418 = vmul.f32 %v379, %v414
    %v419 = vmul.f32 %v379, %v415
    %v420 = vmul.f32 %v379, %v416
    %v421 = vmul.f32 %v379, %v417
    %v422 = vmul.f32 %v383, %v414
    %v423 = vmul.f32 %v383, %v415
    %v424 = vmul.f32 %v383, %v416
    %v425 = vmul.f32 %v383, %v417
    %v426 = vmul.f32 %v387, %v414
    %v427 = vmul.f32 %v387, %v415
    %v428 = vmul.f32 %v387, %v416
    %v429 = vmul.f32 %v387, %v417
    %v430 = vmul.f32 %v391, %v414
    %v431 = vmul.f32 %v391, %v415
    %v432 = vmul.f32 %v391, %v416
    %v433 = vmul.f32 %v391, %v417
    %v434 = vadd.f32 %v332, %v418
    %v435 = vadd.f32 %v333, %v419
    %v436 = vadd.f32 %v334, %v420
    %v437 = vadd.f32 %v335, %v421
    %v438 = vadd.f32 %v336, %v422
    %v439 = vadd.f32 %v337, %v423
    %v440 = vadd.f32 %v338, %v424
    %v441 = vadd.f32 %v339, %v425
    %v442 = vadd.f32 %v340, %v426
    %v443 = vadd.f32 %v341, %v427
    %v444 = vadd.f32 %v342, %v428
    %v445 = vadd.f32 %v343, %v429
    %v446 = vadd.f32 %v344, %v430
    %v447 = vadd.f32 %v345, %v431
    %v448 = vadd.f32 %v346, %v432
    %v449 = vadd.f32 %v347, %v433
    %v452 = vunpack.c.l.s4 1966171168
    %v453 = vunpack.c.0.s8 %v452
    %v454 = vlaneseq
    %v455 = vshrl.u32 %v454, 7
    %v456 = vsub.s32 %v453, %v455
    %v457 = vrot.slane %v39, %v456
    %v458 = vcombine.high %v457, %v457
    %v460 = vunpack.c.l.s4 1966171168
    %v461 = vunpack.c.0.s8 %v460
    %v462 = vlaneseq
    %v463 = vshrl.u32 %v462, 7
    %v464 = vsub.s32 %v461, %v463
    %v465 = vrot.slane %v457, %v464
    %v467 = vunpack.c.l.s4 1966171168
    %v468 = vunpack.c.0.s8 %v467
    %v469 = vlaneseq
    %v470 = vshrl.u32 %v469, 7
    %v471 = vsub.s32 %v468, %v470
    %v472 = vrot.slane %v458, %v471
    %v473 = vcombine.high %v465, %v465
    %v474 = vcombine.high %v472, %v472
    %v475 = vadd.f32 %v373, %v39
    %v476 = vmul.f32 %v39, 0.5
    %v477 = vadd.f32 %v373, %v476
    %v478 = vlaneseq
    %v479 = vshrl.u32 %v478, 7
    %v480 = vsub.s32 0, %v479
    %v481 = vrot.slane %v465, %v480
    %v482 = vlaneseq
    %v483 = vshrl.u32 %v482, 7
    %v484 = vsub.s32 0, %v483
    %v485 = vrot.slane %v472, %v484
    %v486 = vlaneseq
    %v487 = vshrl.u32 %v486, 7
    %v488 = vsub.s32 0, %v487
    %v489 = vrot.slane %v473, %v488
    %v490 = vlaneseq
    %v491 = vshrl.u32 %v490, 7
    %v492 = vsub.s32 0, %v491
    %v493 = vrot.slane %v474, %v492
    %v498 = vmul.f32 %v481, %v477
    %v499 = vmul.f32 %v485, %v477
    %v500 = vmul.f32 %v489, %v477
    %v501 = vmul.f32 %v493, %v477
    %v502 = vadd.f32 %v400, %v498
    %v503 = vadd.f32 %v401, %v499
    %v504 = vadd.f32 %v402, %v500
    %v505 = vadd.f32 %v403, %v501
    %v506 = vmul.f32 %v39, 0.33333334
    %v507 = vadd.f32 %v373, %v506
    %v508 = vmul.f32 %v481, %v507
    %v509 = vmul.f32 %v485, %v507
    %v510 = vmul.f32 %v489, %v507
    %v511 = vmul.f32 %v493, %v507
    %v512 = vmul.f32 %v508, 0.5
    %v513 = vmul.f32 %v509, 0.5
    %v514 = vmul.f32 %v510, 0.5
    %v515 = vmul.f32 %v511, 0.5
    %v516 = vadd.f32 %v400, %v512
    %v517 = vadd.f32 %v401, %v513
    %v518 = vadd.f32 %v402, %v514
    %v519 = vadd.f32 %v403, %v515
    %v520 = vmul.f32 %v481, %v516
    %v521 = vmul.f32 %v481, %v517
    %v522 = vmul.f32 %v481, %v518
    %v523 = vmul.f32 %v481, %v519
    %v524 = vmul.f32 %v485, %v516
    %v525 = vmul.f32 %v485, %v517
    %v526 = vmul.f32 %v485, %v518
    %v527 = vmul.f32 %v485, %v519
    %v528 = vmul.f32 %v489, %v516
    %v529 = vmul.f32 %v489, %v517
    %v530 = vmul.f32 %v489, %v518
    %v531 = vmul.f32 %v489, %v519
    %v532 = vmul.f32 %v493, %v516
    %v533 = vmul.f32 %v493, %v517
    %v534 = vmul.f32 %v493, %v518
    %v535 = vmul.f32 %v493, %v519
    %v536 = vadd.f32 %v434, %v520
    %v537 = vadd.f32 %v435, %v521
    %v538 = vadd.f32 %v436, %v522
    %v539 = vadd.f32 %v437, %v523
    %v540 = vadd.f32 %v438, %v524
    %v541 = vadd.f32 %v439, %v525
    %v542 = vadd.f32 %v440, %v526
    %v543 = vadd.f32 %v441, %v527
    %v544 = vadd.f32 %v442, %v528
    %v545 = vadd.f32 %v443, %v529
    %v546 = vadd.f32 %v444, %v530
    %v547 = vadd.f32 %v445, %v531
    %v548 = vadd.f32 %v446, %v532
    %v549 = vadd.f32 %v447, %v533
    %v550 = vadd.f32 %v448, %v534
    %v551 = vadd.f32 %v449, %v535
    %v554 = vunpack.c.l.s4 1966171168
    %v555 = vunpack.c.0.s8 %v554
    %v556 = vlaneseq
    %v557 = vshrl.u32 %v556, 7
    %v558 = vsub.s32 %v555, %v557
    %v559 = vrot.slane %v40, %v558
    %v560 = vcombine.high %v559, %v559
    %v562 = vunpack.c.l.s4 1966171168
    %v563 = vunpack.c.0.s8 %v562
    %v564 = vlaneseq
    %v565 = vshrl.u32 %v564, 7
    %v566 = vsub.s32 %v563, %v565
    %v567 = vrot.slane %v559, %v566
    %v569 = vunpack.c.l.s4 1966171168
    %v570 = vunpack.c.0.s8 %v569
    %v571 = vlaneseq
    %v572 = vshrl.u32 %v571, 7
    %v573 = vsub.s32 %v570, %v572
    %v574 = vrot.slane %v560, %v573
    %v575 = vcombine.high %v567, %v567
    %v576 = vcombine.high %v574, %v574
    %v577 = vadd.f32 %v475, %v40
    %v578 = vmul.f32 %v40, 0.5
    %v579 = vadd.f32 %v475, %v578
    %v580 = vlaneseq
    %v581 = vshrl.u32 %v580, 7
    %v582 = vsub.s32 0, %v581
    %v583 = vrot.slane %v567, %v582
    %v584 = vlaneseq
    %v585 = vshrl.u32 %v584, 7
    %v586 = vsub.s32 0, %v585
    %v587 = vrot.slane %v574, %v586
    %v588 = vlaneseq
    %v589 = vshrl.u32 %v588, 7
    %v590 = vsub.s32 0, %v589
    %v591 = vrot.slane %v575, %v590
    %v592 = vlaneseq
    %v593 = vshrl.u32 %v592, 7
    %v594 = vsub.s32 0, %v593
    %v595 = vrot.slane %v576, %v594
    %v600 = vmul.f32 %v583, %v579
    %v601 = vmul.f32 %v587, %v579
    %v602 = vmul.f32 %v591, %v579
    %v603 = vmul.f32 %v595, %v579
    %v604 = vadd.f32 %v502, %v600
    %v605 = vadd.f32 %v503, %v601
    %v606 = vadd.f32 %v504, %v602
    %v607 = vadd.f32 %v505, %v603
    %v608 = vmul.f32 %v40, 0.33333334
    %v609 = vadd.f32 %v475, %v608
    %v610 = vmul.f32 %v583, %v609
    %v611 = vmul.f32 %v587, %v609
    %v612 = vmul.f32 %v591, %v609
    %v613 = vmul.f32 %v595, %v609
    %v614 = vmul.f32 %v610, 0.5
    %v615 = vmul.f32 %v611, 0.5
    %v616 = vmul.f32 %v612, 0.5
    %v617 = vmul.f32 %v613, 0.5
    %v618 = vadd.f32 %v502, %v614
    %v619 = vadd.f32 %v503, %v615
    %v620 = vadd.f32 %v504, %v616
    %v621 = vadd.f32 %v505, %v617
    %v622 = vmul.f32 %v583, %v618
    %v623 = vmul.f32 %v583, %v619
    %v624 = vmul.f32 %v583, %v620
    %v625 = vmul.f32 %v583, %v621
    %v626 = vmul.f32 %v587, %v618
    %v627 = vmul.f32 %v587, %v619
    %v628 = vmul.f32 %v587, %v620
    %v629 = vmul.f32 %v587, %v621
    %v630 = vmul.f32 %v591, %v618
    %v631 = vmul.f32 %v591, %v619
    %v632 = vmul.f32 %v591, %v620
    %v633 = vmul.f32 %v591, %v621
    %v634 = vmul.f32 %v595, %v618
    %v635 = vmul.f32 %v595, %v619
    %v636 = vmul.f32 %v595, %v620
    %v637 = vmul.f32 %v595, %v621
    %v638 = vadd.f32 %v536, %v622
    %v639 = vadd.f32 %v537, %v623
    %v640 = vadd.f32 %v538, %v624
    %v641 = vadd.f32 %v539, %v625
    %v642 = vadd.f32 %v540, %v626
    %v643 = vadd.f32 %v541, %v627
    %v644 = vadd.f32 %v542, %v628
    %v645 = vadd.f32 %v543, %v629
    %v646 = vadd.f32 %v544, %v630
    %v647 = vadd.f32 %v545, %v631
    %v648 = vadd.f32 %v546, %v632
    %v649 = vadd.f32 %v547, %v633
    %v650 = vadd.f32 %v548, %v634
    %v651 = vadd.f32 %v549, %v635
    %v652 = vadd.f32 %v550, %v636
    %v653 = vadd.f32 %v551, %v637
    %v656 = vunpack.c.l.s4 1966171168
    %v657 = vunpack.c.0.s8 %v656
    %v658 = vlaneseq
    %v659 = vshrl.u32 %v658, 7
    %v660 = vsub.s32 %v657, %v659
    %v661 = vrot.slane %v41, %v660
    %v662 = vcombine.high %v661, %v661
    %v664 = vunpack.c.l.s4 1966171168
    %v665 = vunpack.c.0.s8 %v664
    %v666 = vlaneseq
    %v667 = vshrl.u32 %v666, 7
    %v668 = vsub.s32 %v665, %v667
    %v669 = vrot.slane %v661, %v668
    %v671 = vunpack.c.l.s4 1966171168
    %v672 = vunpack.c.0.s8 %v671
    %v673 = vlaneseq
    %v674 = vshrl.u32 %v673, 7
    %v675 = vsub.s32 %v672, %v674
    %v676 = vrot.slane %v662, %v675
    %v677 = vcombine.high %v669, %v669
    %v678 = vcombine.high %v676, %v676
    %v679 = vadd.f32 %v577, %v41
    %v680 = vmul.f32 %v41, 0.5
    %v681 = vadd.f32 %v577, %v680
    %v682 = vlaneseq
    %v683 = vshrl.u32 %v682, 7
    %v684 = vsub.s32 0, %v683
    %v685 = vrot.slane %v669, %v684
    %v686 = vlaneseq
    %v687 = vshrl.u32 %v686, 7
    %v688 = vsub.s32 0, %v687
    %v689 = vrot.slane %v676, %v688
    %v690 = vlaneseq
    %v691 = vshrl.u32 %v690, 7
    %v692 = vsub.s32 0, %v691
    %v693 = vrot.slane %v677, %v692
    %v694 = vlaneseq
    %v695 = vshrl.u32 %v694, 7
    %v696 = vsub.s32 0, %v695
    %v697 = vrot.slane %v678, %v696
    %v702 = vmul.f32 %v685, %v681
    %v703 = vmul.f32 %v689, %v681
    %v704 = vmul.f32 %v693, %v681
    %v705 = vmul.f32 %v697, %v681
    %v706 = vadd.f32 %v604, %v702
    %v707 = vadd.f32 %v605, %v703
    %v708 = vadd.f32 %v606, %v704
    %v709 = vadd.f32 %v607, %v705
    %v710 = vmul.f32 %v41, 0.33333334
    %v711 = vadd.f32 %v577, %v710
    %v712 = vmul.f32 %v685, %v711
    %v713 = vmul.f32 %v689, %v711
    %v714 = vmul.f32 %v693, %v711
    %v715 = vmul.f32 %v697, %v711
    %v716 = vmul.f32 %v712, 0.5
    %v717 = vmul.f32 %v713, 0.5
    %v718 = vmul.f32 %v714, 0.5
    %v719 = vmul.f32 %v715, 0.5
    %v720 = vadd.f32 %v604, %v716
    %v721 = vadd.f32 %v605, %v717
    %v722 = vadd.f32 %v606, %v718
    %v723 = vadd.f32 %v607, %v719
    %v724 = vmul.f32 %v685, %v720
    %v725 = vmul.f32 %v685, %v721
    %v726 = vmul.f32 %v685, %v722
    %v727 = vmul.f32 %v685, %v723
    %v728 = vmul.f32 %v689, %v720
    %v729 = vmul.f32 %v689, %v721
    %v730 = vmul.f32 %v689, %v722
    %v731 = vmul.f32 %v689, %v723
    %v732 = vmul.f32 %v693, %v720
    %v733 = vmul.f32 %v693, %v721
    %v734 = vmul.f32 %v693, %v722
    %v735 = vmul.f32 %v693, %v723
    %v736 = vmul.f32 %v697, %v720
    %v737 = vmul.f32 %v697, %v721
    %v738 = vmul.f32 %v697, %v722
    %v739 = vmul.f32 %v697, %v723
    %v740 = vadd.f32 %v638, %v724
    %v741 = vadd.f32 %v639, %v725
    %v742 = vadd.f32 %v640, %v726
    %v743 = vadd.f32 %v641, %v727
    %v744 = vadd.f32 %v642, %v728
    %v745 = vadd.f32 %v643, %v729
    %v746 = vadd.f32 %v644, %v730
    %v747 = vadd.f32 %v645, %v731
    %v748 = vadd.f32 %v646, %v732
    %v749 = vadd.f32 %v647, %v733
    %v750 = vadd.f32 %v648, %v734
    %v751 = vadd.f32 %v649, %v735
    %v752 = vadd.f32 %v650, %v736
    %v753 = vadd.f32 %v651, %v737
    %v754 = vadd.f32 %v652, %v738
    %v755 = vadd.f32 %v653, %v739
    %756 = vst [vmem:[#allocation5] sm:$0xf] %v679
    %757 = vst [vmem:[#allocation6] sm:$0xf] %v706
    %758 = vst [vmem:[#allocation6 + $0x4] sm:$0xf] %v707
    %759 = vst [vmem:[#allocation6 + $0x8] sm:$0xf] %v708
    %760 = vst [vmem:[#allocation6 + $0xc] sm:$0xf] %v709
    %761 = vst [vmem:[#allocation8] sm:$0xf] %v740
    %762 = vst [vmem:[#allocation8 + $0x4] sm:$0xf] %v741
    %763 = vst [vmem:[#allocation8 + $0x8] sm:$0xf] %v742
    %764 = vst [vmem:[#allocation8 + $0xc] sm:$0xf] %v743
    %765 = vst [vmem:[#allocation8 + $0x10] sm:$0xf] %v744
    %766 = vst [vmem:[#allocation8 + $0x14] sm:$0xf] %v745
    %767 = vst [vmem:[#allocation8 + $0x18] sm:$0xf] %v746
    %768 = vst [vmem:[#allocation8 + $0x1c] sm:$0xf] %v747
    %769 = vst [vmem:[#allocation8 + $0x20] sm:$0xf] %v748
    %770 = vst [vmem:[#allocation8 + $0x24] sm:$0xf] %v749
    %771 = vst [vmem:[#allocation8 + $0x28] sm:$0xf] %v750
    %772 = vst [vmem:[#allocation8 + $0x2c] sm:$0xf] %v751
    %773 = vst [vmem:[#allocation8 + $0x30] sm:$0xf] %v752
    %774 = vst [vmem:[#allocation8 + $0x34] sm:$0xf] %v753
    %775 = vst [vmem:[#allocation8 + $0x38] sm:$0xf] %v754
    %776 = vst [vmem:[#allocation8 + $0x3c] sm:$0xf] %v755
    // Predicated region
    $region10: #{tpu_custom_call.1} parent=1 // pred_check
      _
    $region11: #{tpu_custom_call.1} parent=1 // pred_check_branch
      %778 = sbr.rel (0) target = $region13
    $region12: #{tpu_custom_call.1} parent=1 // pred_region
      %s780 = ssub.s32 64, 64
      %781 = vsyncadd [#allocation4], %s780
      %s783 = sshll.u32 [#allocation5], 4
      %s784 = int_to_ptr.vmem [resolvable:$true] %s783
      %786 = dma.vmem_to_hbm [thread:$0]  %s784, 64, %s1, [#allocation4]
    $region13: #{tpu_custom_call.1} parent=1 // pred_fallthru
      _
    // Predicated region
    $region14: #{tpu_custom_call.1} parent=1 // pred_check
      _
    $region15: #{tpu_custom_call.1} parent=1 // pred_check_branch
      %788 = sbr.rel (0) target = $region17
    $region16: #{tpu_custom_call.1} parent=1 // pred_region
      %s790 = ssub.s32 256, 256
      %791 = vsyncadd [#allocation7], %s790
      %s792 = sshll.u32 [#allocation6], 4
      %s793 = int_to_ptr.vmem [resolvable:$true] %s792
      %798 = dma.vmem_to_hbm [thread:$0]  %s793, 256, %s2, [#allocation7], 64, 64, 4
    $region17: #{tpu_custom_call.1} parent=1 // pred_fallthru
      _
    // Predicated region
    $region18: #{tpu_custom_call.1} parent=1 // pred_check
      _
    $region19: #{tpu_custom_call.1} parent=1 // pred_check_branch
      %800 = sbr.rel (0) target = $region21
    $region20: #{tpu_custom_call.1} parent=1 // pred_region
      %s802 = ssub.s32 1024, 1024
      %803 = vsyncadd [#allocation7], %s802
      %s804 = sshll.u32 [#allocation8], 4
      %s805 = int_to_ptr.vmem [resolvable:$true] %s804
      %810 = dma.vmem_to_hbm [thread:$0]  %s805, 1024, %s3, [#allocation7], 64, 64, 4
    $region21: #{tpu_custom_call.1} parent=1 // pred_fallthru
      _
    // Predicated region
    $region22: #{tpu_custom_call.1} parent=1 // pred_check
      _
    $region23: #{tpu_custom_call.1} parent=1 // pred_check_branch
      %812 = sbr.rel (0) target = $region25
    $region24: #{tpu_custom_call.1} parent=1 // pred_region
      %813 = dma.done [#allocation4], 64
    $region25: #{tpu_custom_call.1} parent=1 // pred_fallthru
      _
    // Predicated region
    $region26: #{tpu_custom_call.1} parent=1 // pred_check
      _
    $region27: #{tpu_custom_call.1} parent=1 // pred_check_branch
      %815 = sbr.rel (0) target = $region29
    $region28: #{tpu_custom_call.1} parent=1 // pred_region
      %816 = dma.done [#allocation7], 256
    $region29: #{tpu_custom_call.1} parent=1 // pred_fallthru
      _
    // Predicated region
    $region30: #{tpu_custom_call.1} parent=1 // pred_check
      _
    $region31: #{tpu_custom_call.1} parent=1 // pred_check_branch
      %818 = sbr.rel (0) target = $region33
    $region32: #{tpu_custom_call.1} parent=1 // pred_region
      %819 = dma.done [#allocation7], 1024
    $region33: #{tpu_custom_call.1} parent=1 // pred_fallthru
      _
    %820 = vsyncpa [#allocation3], 1
    %821 = vsyncpa [#allocation4], 1
    %822 = vsyncpa [#allocation7], 1

</llo_original>
